<compile_context>
chip_gen: v6e
topology: v6e:2x2x1
jax: 0.10.0
libtpu: 0.0.40
codegen_flags: <defaults>
</compile_context>

<pallas_src>
import functools

import jax
import jax.numpy as jnp
from jax.experimental import pallas as pl
from jax.experimental.pallas import tpu as pltpu

_SQRT_2_OVER_PI = 0.7978845608028654
_GELU_C = 0.044715


def _gelu_tanh(h):
    # tanh-approximate GELU: tanh -> EUP (free-ish slot), rest is ~5 VPU ops.
    return 0.5 * h * (1.0 + jnp.tanh(_SQRT_2_OVER_PI * (h + _GELU_C * h * h * h)))


def _layernorm_f32(x_ref, gamma_ref, beta_ref):
    # LayerNorm over the last dim in f32 (eps matches torch default 1e-5).
    x = x_ref[...].astype(jnp.float32)
    mean = jnp.mean(x, axis=-1, keepdims=True)
    cent = x - mean
    var = jnp.mean(cent * cent, axis=-1, keepdims=True)
    xn = cent * jax.lax.rsqrt(var + 1e-5)
    return xn * gamma_ref[...].astype(jnp.float32) + beta_ref[...].astype(jnp.float32)


# ----------------------------- kernels -------------------------------------


def ffn_resident_kernel(x_ref, gamma_ref, beta_ref, w1_ref, w2_ref, o_ref):
    # Weights are fully VMEM-resident; one grid axis over row tiles.
    xn = _layernorm_f32(x_ref, gamma_ref, beta_ref).astype(w1_ref.dtype)
    h = jnp.dot(xn, w1_ref[...], preferred_element_type=jnp.float32)
    h = _gelu_tanh(h)
    o = jnp.dot(h.astype(w2_ref.dtype), w2_ref[...], preferred_element_type=jnp.float32)
    o_ref[...] = o.astype(o_ref.dtype)


def ffn_streaming_kernel(x_ref, gamma_ref, beta_ref, w1_ref, w2_ref, o_ref,
                         xn_ref, acc_ref):
    # grid = (row_tiles, f_tiles); F axis is the reduction ("arbitrary", last).
    f = pl.program_id(1)

    @pl.when(f == 0)
    def _():
        xn_ref[...] = _layernorm_f32(x_ref, gamma_ref, beta_ref).astype(xn_ref.dtype)
        acc_ref[...] = jnp.zeros_like(acc_ref)

    h = jnp.dot(xn_ref[...], w1_ref[...], preferred_element_type=jnp.float32)
    h = _gelu_tanh(h)
    acc_ref[...] += jnp.dot(h.astype(w2_ref.dtype), w2_ref[...],
                            preferred_element_type=jnp.float32)

    @pl.when(f == pl.num_programs(1) - 1)
    def _():
        o_ref[...] = acc_ref[...].astype(o_ref.dtype)


# ----------------------------- helpers --------------------------------------


def _cdiv(a, b):
    return (a + b - 1) // b


def _round_up(a, b):
    return _cdiv(a, b) * b


def _pick_f_tile(f_pad, target, align=128):
    # largest multiple of `align` dividing f_pad that is <= target
    best = align
    t = align
    while t <= min(f_pad, target):
        if f_pad % t == 0:
            best = t
        t += align
    return best


def _row_tiling(N, row_tile):
    # Rebalanced row tiles: minimal zero-row padding, and >=2 tiles whenever
    # possible so the "parallel" row axis feeds both v7x TensorCores.
    ntiles = _cdiv(N, row_tile)
    if ntiles < 2 and N > 16:
        ntiles = 2
    tm = _round_up(_cdiv(N, ntiles), 16)   # 16-sublane aligned (bf16 scratch tiling)
    return tm, ntiles


@functools.lru_cache(maxsize=1)
def _vmem_capacity_bytes():
    try:
        cap = int(getattr(pltpu.get_tpu_info(), "vmem_capacity_bytes", 0))
        if cap > 0:
            return cap
    except Exception:
        pass
    return 64 << 20   # conservative fallback (v7x per-TensorCore VMEM)


def _buffered_spec(shape, index_map, depth=3):
    # depth-3 pipelining on streamed weight slabs hides the bubble at each
    # row-tile boundary (f wraps to 0); fall back cleanly if unsupported.
    try:
        return pl.BlockSpec(shape, index_map, pipeline_mode=pl.Buffered(depth))
    except Exception:
        return pl.BlockSpec(shape, index_map)


# ----------------------------- wrapper ---------------------------------------


@functools.partial(jax.jit, static_argnames=("row_tile", "f_tile", "force_streaming"))
def feed_forward(x, gamma, beta, w1, w2, *, row_tile=256, f_tile=512,
                 force_streaming=False):
    """x: (B, T, D). gamma/beta: (D,). w1: (D, F). w2: (F, D) (pre-transposed to (in, out))."""
    B, T, D = x.shape
    F = w1.shape[1]
    N = B * T
    itemsize = x.dtype.itemsize

    tm, n_row_tiles = _row_tiling(N, row_tile)
    n_pad = tm * n_row_tiles

    # Pad F to a multiple of 128; zero-padded hidden units are exact no-ops
    # (GELU(0)=0 and the padded W2 rows are zero).
    f_pad = _round_up(F, 128)

    x2 = x.reshape(N, D)
    if n_pad != N:
        x2 = jnp.pad(x2, ((0, n_pad - N), (0, 0)))

    # bf16 weights: halve DMA bytes and hit MXU bf16 peak; accumulation stays f32.
    w1b = w1.astype(jnp.bfloat16)
    w2b = w2.astype(jnp.bfloat16)
    if f_pad != F:
        w1b = jnp.pad(w1b, ((0, 0), (0, f_pad - F)))
        w2b = jnp.pad(w2b, ((0, f_pad - F), (0, 0)))

    gamma2 = gamma.reshape(1, D).astype(jnp.float32)
    beta2 = beta.reshape(1, D).astype(jnp.float32)

    vmem_cap = _vmem_capacity_bytes()
    vmem_budget = int(0.75 * vmem_cap)    # leave headroom for Mosaic internals (esp. v7x)

    flops = 2 * 2 * n_pad * D * f_pad         # two matmuls
    transc = n_pad * f_pad                     # one tanh per hidden element

    # --------------------------- resident path ------------------------------
    resident_need = (
        2 * 2 * D * f_pad * 2                  # W1 + W2 bf16, 2 buffers each (conservative)
        + 2 * 2 * tm * D * itemsize            # x + out tiles, double-buffered
        + tm * f_pad * 4                       # (tm, f_pad) f32 hidden slab
        + 2 * tm * D * 4                       # xn f32 + f32 output temporaries
        + (2 << 20)                            # margin
    )
    use_resident = (not force_streaming) and (resident_need <= vmem_budget)

    if use_resident:
        cost = pl.CostEstimate(
            flops=flops,
            transcendentals=transc,
            bytes_accessed=2 * n_pad * D * itemsize + 2 * D * f_pad * 2,  # weights once
        )
        out = pl.pallas_call(
            ffn_resident_kernel,
            out_shape=jax.ShapeDtypeStruct((n_pad, D), x.dtype),
            grid_spec=pltpu.PrefetchScalarGridSpec(
                num_scalar_prefetch=0,
                grid=(n_row_tiles,),
                in_specs=[
                    pl.BlockSpec((tm, D), lambda i: (i, 0)),      # x row tile
                    pl.BlockSpec((1, D), lambda i: (0, 0)),       # gamma
                    pl.BlockSpec((1, D), lambda i: (0, 0)),       # beta
                    pl.BlockSpec((D, f_pad), lambda i: (0, 0)),   # W1 resident
                    pl.BlockSpec((f_pad, D), lambda i: (0, 0)),   # W2 resident
                ],
                out_specs=pl.BlockSpec((tm, D), lambda i: (i, 0)),
            ),
            compiler_params=pltpu.CompilerParams(
                dimension_semantics=("parallel",),                # rows across TCs
                vmem_limit_bytes=int(min(max(resident_need, 16 << 20), vmem_budget)),
            ),
            cost_estimate=cost,
        )(x2, gamma2, beta2, w1b, w2b)

    # --------------------------- streaming path -----------------------------
    else:
        tf = _pick_f_tile(f_pad, f_tile)
        stream_need = (
            2 * 3 * D * tf * 2                 # W1 + W2 slabs, bf16, 3 buffers each
            + 2 * 2 * tm * D * itemsize        # x + out tiles, double-buffered
            + tm * D * (4 + 2)                 # acc (f32) + xn (bf16) scratch
            + tm * tf * 4                      # (tm, tf) f32 hidden slab
            + (2 << 20)
        )
        cost = pl.CostEstimate(
            flops=flops,
            transcendentals=transc,
            # streamed weights are re-fetched once per row tile
            bytes_accessed=2 * n_pad * D * itemsize + n_row_tiles * 2 * D * f_pad * 2,
        )
        out = pl.pallas_call(
            ffn_streaming_kernel,
            out_shape=jax.ShapeDtypeStruct((n_pad, D), x.dtype),
            grid_spec=pltpu.PrefetchScalarGridSpec(
                num_scalar_prefetch=0,
                grid=(n_row_tiles, f_pad // tf),
                in_specs=[
                    pl.BlockSpec((tm, D), lambda i, f: (i, 0)),   # x (constant over f)
                    pl.BlockSpec((1, D), lambda i, f: (0, 0)),    # gamma
                    pl.BlockSpec((1, D), lambda i, f: (0, 0)),    # beta
                    _buffered_spec((D, tf), lambda i, f: (0, f)), # W1 slab, depth-3
                    _buffered_spec((tf, D), lambda i, f: (f, 0)), # W2 slab, depth-3
                ],
                out_specs=pl.BlockSpec((tm, D), lambda i, f: (i, 0)),
                scratch_shapes=[
                    pltpu.VMEM((tm, D), jnp.bfloat16),            # cached LayerNorm'd xn
                    pltpu.VMEM((tm, D), jnp.float32),             # f32 output accumulator
                ],
            ),
            compiler_params=pltpu.CompilerParams(
                dimension_semantics=("parallel", "arbitrary"),
                vmem_limit_bytes=int(min(max(stream_need, 16 << 20), vmem_budget)),
            ),
            cost_estimate=cost,
        )(x2, gamma2, beta2, w1b, w2b)

    return out[:N].reshape(B, T, D)


# ----------------------------- demo / check ----------------------------------

if __name__ == "__main__":
    # Small lane-dense demo config: d_embed=128, d_ff=4*d_embed.
    # T=12 exercises the row-padding path and yields 2 row tiles (both TCs on v7x).
    B, T, d_embed = 2, 12, 128
    d_ff = 4 * d_embed

    key = jax.random.PRNGKey(0)
    kx, k1, k2 = jax.random.split(key, 3)

    x = jax.random.normal(kx, (B, T, d_embed), dtype=jnp.float32)

    # nn.Linear weights ~ Normal(0, 0.02), bias=False; stored transposed (in, out).
    w1 = 0.02 * jax.random.normal(k1, (d_embed, d_ff), dtype=jnp.float32)   # (D, F)
    w2 = 0.02 * jax.random.normal(k2, (d_ff, d_embed), dtype=jnp.float32)   # (F, D)

    # LayerNorm params: gamma=1, beta=0 (torch defaults)
    gamma = jnp.ones((d_embed,), dtype=jnp.float32)
    beta = jnp.zeros((d_embed,), dtype=jnp.float32)

    # Pure-JAX f32 reference (exact erf GELU, as in nn.GELU default).
    mu = x.mean(-1, keepdims=True)
    var = ((x - mu) ** 2).mean(-1, keepdims=True)
    xn = (x - mu) / jnp.sqrt(var + 1e-5) * gamma + beta
    h = xn @ w1
    h = 0.5 * h * (1.0 + jax.lax.erf(h / jnp.sqrt(2.0)))
    y_ref = h @ w2

    # Resident-weight path (weights fit VMEM -> fetched once, single grid axis).
    y_res = feed_forward(x, gamma, beta, w1, w2)
    jax.block_until_ready(y_res)
    assert y_res.shape == y_ref.shape
    assert jnp.allclose(y_res, y_ref, atol=2e-2, rtol=2e-2), "resident path mismatch"

    # Forced weight-streaming path (exercises F-axis accumulation + Buffered(3)).
    y_str = feed_forward(x, gamma, beta, w1, w2, f_tile=256, force_streaming=True)
    jax.block_until_ready(y_str)
    assert jnp.allclose(y_str, y_ref, atol=2e-2, rtol=2e-2), "streaming path mismatch"

    print("KERNEL_OK")
</pallas_src>

<mosaic_0001>
module attributes {stable_mosaic.version = 11 : i64} {
  func.func @ffn_resident_kernel(%arg0: i32, %arg1: memref<16x128xf32, #tpu.memory_space<vmem>>, %arg2: memref<1x128xf32, #tpu.memory_space<vmem>>, %arg3: memref<1x128xf32, #tpu.memory_space<vmem>>, %arg4: memref<128x512xbf16, #tpu.memory_space<vmem>>, %arg5: memref<512x128xbf16, #tpu.memory_space<vmem>>, %arg6: memref<16x128xf32, #tpu.memory_space<vmem>>) attributes {dimension_semantics = [#tpu.dimension_semantics<parallel>], iteration_bounds = array<i64: 2>, scalar_prefetch = 0 : i64, scratch_operands = 0 : i64, tpu.core_type = #tpu.core_type<tc>, window_params = [{transform_indices = @transform_0, window_bounds = array<i64: 16, 128>}, {pipeline_mode = #tpu.pipeline_mode<synchronous>, transform_indices = @transform_1, window_bounds = array<i64: 1, 128>}, {pipeline_mode = #tpu.pipeline_mode<synchronous>, transform_indices = @transform_2, window_bounds = array<i64: 1, 128>}, {pipeline_mode = #tpu.pipeline_mode<synchronous>, transform_indices = @transform_3, window_bounds = array<i64: 128, 512>}, {pipeline_mode = #tpu.pipeline_mode<synchronous>, transform_indices = @transform_4, window_bounds = array<i64: 512, 128>}, {transform_indices = @transform_5, window_bounds = array<i64: 16, 128>}]} {
    %c0 = arith.constant 0 : index
    %c0_0 = arith.constant 0 : index
    %0 = vector.load %arg1[%c0, %c0_0] : memref<16x128xf32, #tpu.memory_space<vmem>>, vector<16x128xf32>
    %cst = arith.constant dense<0.000000e+00> : vector<16xf32>
    %1 = vector.multi_reduction <add>, %0, %cst [1] : vector<16x128xf32> to vector<16xf32>
    %2 = vector.shape_cast %1 : vector<16xf32> to vector<16x1xf32>
    %cst_1 = arith.constant 1.280000e+02 : f32
    %3 = vector.broadcast %cst_1 : f32 to vector<16x1xf32>
    %4 = arith.divf %2, %3 : vector<16x1xf32>
    %5 = vector.broadcast %4 : vector<16x1xf32> to vector<16x128xf32>
    %6 = arith.subf %0, %5 : vector<16x128xf32>
    %7 = arith.mulf %6, %6 : vector<16x128xf32>
    %cst_2 = arith.constant dense<0.000000e+00> : vector<16xf32>
    %8 = vector.multi_reduction <add>, %7, %cst_2 [1] : vector<16x128xf32> to vector<16xf32>
    %9 = vector.shape_cast %8 : vector<16xf32> to vector<16x1xf32>
    %cst_3 = arith.constant 1.280000e+02 : f32
    %10 = vector.broadcast %cst_3 : f32 to vector<16x1xf32>
    %11 = arith.divf %9, %10 : vector<16x1xf32>
    %cst_4 = arith.constant 9.99999974E-6 : f32
    %12 = vector.broadcast %cst_4 : f32 to vector<16x1xf32>
    %13 = arith.addf %11, %12 : vector<16x1xf32>
    %14 = math.rsqrt %13 : vector<16x1xf32>
    %15 = vector.broadcast %14 : vector<16x1xf32> to vector<16x128xf32>
    %16 = arith.mulf %6, %15 : vector<16x128xf32>
    %c0_5 = arith.constant 0 : index
    %c0_6 = arith.constant 0 : index
    %17 = vector.load %arg2[%c0_5, %c0_6] : memref<1x128xf32, #tpu.memory_space<vmem>>, vector<1x128xf32>
    %18 = vector.broadcast %17 : vector<1x128xf32> to vector<16x128xf32>
    %19 = arith.mulf %16, %18 : vector<16x128xf32>
    %c0_7 = arith.constant 0 : index
    %c0_8 = arith.constant 0 : index
    %20 = vector.load %arg3[%c0_7, %c0_8] : memref<1x128xf32, #tpu.memory_space<vmem>>, vector<1x128xf32>
    %21 = vector.broadcast %20 : vector<1x128xf32> to vector<16x128xf32>
    %22 = arith.addf %19, %21 : vector<16x128xf32>
    %23 = arith.truncf %22 : vector<16x128xf32> to vector<16x128xbf16>
    %c0_9 = arith.constant 0 : index
    %c0_10 = arith.constant 0 : index
    %24 = vector.load %arg4[%c0_9, %c0_10] : memref<128x512xbf16, #tpu.memory_space<vmem>>, vector<128x512xbf16>
    %cst_11 = arith.constant dense<0.000000e+00> : vector<16x512xf32>
    %25 = tpu.matmul %23, %24, %cst_11 {dimension_numbers = #tpu.dot_dimension_numbers<[1], [0], [0], [1], [0, 0, 1, 1], [], []>} : vector<16x128xbf16>, vector<128x512xbf16>, vector<16x512xf32> -> vector<16x512xf32>
    %cst_12 = arith.constant 5.000000e-01 : f32
    %26 = vector.broadcast %cst_12 : f32 to vector<16x512xf32>
    %27 = arith.mulf %26, %25 : vector<16x512xf32>
    %cst_13 = arith.constant 4.471500e-02 : f32
    %28 = vector.broadcast %cst_13 : f32 to vector<16x512xf32>
    %29 = arith.mulf %28, %25 : vector<16x512xf32>
    %30 = arith.mulf %29, %25 : vector<16x512xf32>
    %31 = arith.mulf %30, %25 : vector<16x512xf32>
    %32 = arith.addf %25, %31 : vector<16x512xf32>
    %cst_14 = arith.constant 0.797884583 : f32
    %33 = vector.broadcast %cst_14 : f32 to vector<16x512xf32>
    %34 = arith.mulf %33, %32 : vector<16x512xf32>
    %35 = math.tanh %34 : vector<16x512xf32>
    %cst_15 = arith.constant 1.000000e+00 : f32
    %36 = vector.broadcast %cst_15 : f32 to vector<16x512xf32>
    %37 = arith.addf %36, %35 : vector<16x512xf32>
    %38 = arith.mulf %27, %37 : vector<16x512xf32>
    %39 = arith.truncf %38 : vector<16x512xf32> to vector<16x512xbf16>
    %c0_16 = arith.constant 0 : index
    %c0_17 = arith.constant 0 : index
    %40 = vector.load %arg5[%c0_16, %c0_17] : memref<512x128xbf16, #tpu.memory_space<vmem>>, vector<512x128xbf16>
    %cst_18 = arith.constant dense<0.000000e+00> : vector<16x128xf32>
    %41 = tpu.matmul %39, %40, %cst_18 {dimension_numbers = #tpu.dot_dimension_numbers<[1], [0], [0], [1], [0, 0, 1, 1], [], []>} : vector<16x512xbf16>, vector<512x128xbf16>, vector<16x128xf32> -> vector<16x128xf32>
    %c0_19 = arith.constant 0 : index
    %c0_20 = arith.constant 0 : index
    %42 = vector.load %arg6[%c0_19, %c0_20] : memref<16x128xf32, #tpu.memory_space<vmem>>, vector<16x128xf32>
    tpu.vector_store %arg6[%c0_19, %c0_20], %41 {strides = array<i32>} : memref<16x128xf32, #tpu.memory_space<vmem>>, vector<16x128xf32>,
    return
  }
  func.func @transform_0(%arg0: i32) -> (i32, i32) {
    %c0_i32 = arith.constant 0 : i32
    %c0_i32_0 = arith.constant 0 : i32
    return %arg0, %c0_i32 : i32, i32
  }
  func.func @transform_1(%arg0: i32) -> (i32, i32) {
    %c0_i32 = arith.constant 0 : i32
    %c0_i32_0 = arith.constant 0 : i32
    %c0_i32_1 = arith.constant 0 : i32
    return %c0_i32, %c0_i32_0 : i32, i32
  }
  func.func @transform_2(%arg0: i32) -> (i32, i32) {
    %c0_i32 = arith.constant 0 : i32
    %c0_i32_0 = arith.constant 0 : i32
    %c0_i32_1 = arith.constant 0 : i32
    return %c0_i32, %c0_i32_0 : i32, i32
  }
  func.func @transform_3(%arg0: i32) -> (i32, i32) {
    %c0_i32 = arith.constant 0 : i32
    %c0_i32_0 = arith.constant 0 : i32
    %c0_i32_1 = arith.constant 0 : i32
    return %c0_i32, %c0_i32_0 : i32, i32
  }
  func.func @transform_4(%arg0: i32) -> (i32, i32) {
    %c0_i32 = arith.constant 0 : i32
    %c0_i32_0 = arith.constant 0 : i32
    %c0_i32_1 = arith.constant 0 : i32
    return %c0_i32, %c0_i32_0 : i32, i32
  }
  func.func @transform_5(%arg0: i32) -> (i32, i32) {
    %c0_i32 = arith.constant 0 : i32
    %c0_i32_0 = arith.constant 0 : i32
    return %arg0, %c0_i32 : i32, i32
  }
}

</mosaic_0001>

<llo_original>
// kernel: feed_forward.1
$region0: #{feed_forward.1}
  #allocation0 [shape = 'u32[]', space=smem, size = 0x4, offset = 0x4, fixed_abs, tag = 'smem constant byte address 0x4 - core index']
  #allocation1 [shape = 'u32[144,128]{1,0:T(1,128)}', space=vmem, size = 0x12000, scoped, tag = 'internal scratch']
  %s0 = inlined_call_operand.vmem [shape: f32[32,128], index: 0, kind: input, shape index: {}]
  %s1 = inlined_call_operand.vmem [shape: f32[1,128], index: 1, kind: input, shape index: {}]
  %s2 = inlined_call_operand.vmem [shape: f32[1,128], index: 2, kind: input, shape index: {}]
  %s3 = inlined_call_operand.vmem [shape: bf16[128,512], index: 3, kind: input, shape index: {}]
  %s4 = inlined_call_operand.vmem [shape: bf16[512,128], index: 4, kind: input, shape index: {}]
  %s5 = inlined_call_operand.vmem [shape: f32[32,128], index: 5, kind: output, shape index: {}]
  %s6 = sld [smem:[#allocation0]]
  $region53: #{feed_forward.1} parent=0
    _
  %s8 = ssub.s32 1, %s6
  %s9 = scalar_select 0, %s8, %s6
  loop: start=0, step=1, limit=4
  $region2: #{feed_forward.1} parent=0 // loop_pre_header
    _
  $region3: #{feed_forward.1} parent=0 // loop_header
    %s11 = sphi 0, %s15
    %p12 = scmp.ge.s32.totalorder %s11, 4
    %s21 = sphi 0, %s23
    %s24 = sphi 0, %s21
    %s25 = sphi 0, %s24
    %s41 = sphi 0, %s25
    %s45 = sphi 0, %s45
    %s47 = sphi 0, %s45
    %s48 = sphi 0, %s47
    %s62 = sphi 0, %s48
    %s66 = sphi 0, %s66
    %s68 = sphi 0, %s66
    %s69 = sphi 0, %s68
    %s83 = sphi 0, %s69
    %s87 = sphi 0, %s87
    %s89 = sphi 0, %s87
    %s90 = sphi 0, %s89
    %s104 = sphi 0, %s90
    %s108 = sphi 0, %s108
    %s110 = sphi 0, %s108
    %s111 = sphi 0, %s110
    %s125 = sphi 0, %s111
    %s131 = sphi 0, %s133
    %s134 = sphi 0, %s131
    %s135 = sphi 0, %s134
    %s151 = sphi 0, %s135
  $region4: #{feed_forward.1} parent=0 // loop_header_branch
    %14 = sbr.rel (%p12) target = $region8
  $region5: #{feed_forward.1} parent=0 // loop_body
    %s16 = ssub.s32 %s11, 1
    %s17 = ssub.s32 %s11, 2
    %s18 = sadd.s32 %s11, 1
    %s19 = ssub.s32 %s11, %s18
    %p20 = scmp.eq.s32.totalorder %s19, 0
    %s22 = sadd.s32 %s21, 1
    %s23 = scalar_select %p20, %s21, %s22
    %p26 = pneg %p20
    %p27 = scmp.eq.s32.totalorder %s11, 1
    %p28 = por %p26, %p27
    %p29 = scmp.ne.s32.totalorder %s21, %s24
    %p30 = scmp.eq.s32.totalorder %s11, 0
    %p31 = por %p29, %p30
    %p32 = scmp.ne.s32.totalorder %s21, %s24
    %p33 = scmp.eq.s32.totalorder %s16, 1
    %p34 = por %p32, %p33
    %p35 = scmp.ne.s32.totalorder %s24, %s25
    %p36 = scmp.eq.s32.totalorder %s16, 0
    %p37 = por %p35, %p36
    %p38 = scmp.ne.s32.totalorder %s24, %s25
    %p39 = scmp.eq.s32.totalorder %s17, 1
    %p40 = por %p38, %p39
    %p42 = scmp.ne.s32.totalorder %s25, %s41
    %p43 = scmp.eq.s32.totalorder %s17, 0
    %p44 = por %p42, %p43
    %s46 = sadd.s32 %s45, 1
    %p49 = scmp.eq.s32.totalorder %s11, 1
    %p50 = scmp.ne.s32.totalorder %s45, %s47
    %p51 = scmp.eq.s32.totalorder %s11, 0
    %p52 = por %p50, %p51
    %p53 = scmp.ne.s32.totalorder %s45, %s47
    %p54 = scmp.eq.s32.totalorder %s16, 1
    %p55 = por %p53, %p54
    %p56 = scmp.ne.s32.totalorder %s47, %s48
    %p57 = scmp.eq.s32.totalorder %s16, 0
    %p58 = por %p56, %p57
    %p59 = scmp.ne.s32.totalorder %s47, %s48
    %p60 = scmp.eq.s32.totalorder %s17, 1
    %p61 = por %p59, %p60
    %p63 = scmp.ne.s32.totalorder %s48, %s62
    %p64 = scmp.eq.s32.totalorder %s17, 0
    %p65 = por %p63, %p64
    %s67 = sadd.s32 %s66, 1
    %p70 = scmp.eq.s32.totalorder %s11, 1
    %p71 = scmp.ne.s32.totalorder %s66, %s68
    %p72 = scmp.eq.s32.totalorder %s11, 0
    %p73 = por %p71, %p72
    %p74 = scmp.ne.s32.totalorder %s66, %s68
    %p75 = scmp.eq.s32.totalorder %s16, 1
    %p76 = por %p74, %p75
    %p77 = scmp.ne.s32.totalorder %s68, %s69
    %p78 = scmp.eq.s32.totalorder %s16, 0
    %p79 = por %p77, %p78
    %p80 = scmp.ne.s32.totalorder %s68, %s69
    %p81 = scmp.eq.s32.totalorder %s17, 1
    %p82 = por %p80, %p81
    %p84 = scmp.ne.s32.totalorder %s69, %s83
    %p85 = scmp.eq.s32.totalorder %s17, 0
    %p86 = por %p84, %p85
    %s88 = sadd.s32 %s87, 1
    %p91 = scmp.eq.s32.totalorder %s11, 1
    %p92 = scmp.ne.s32.totalorder %s87, %s89
    %p93 = scmp.eq.s32.totalorder %s11, 0
    %p94 = por %p92, %p93
    %p95 = scmp.ne.s32.totalorder %s87, %s89
    %p96 = scmp.eq.s32.totalorder %s16, 1
    %p97 = por %p95, %p96
    %p98 = scmp.ne.s32.totalorder %s89, %s90
    %p99 = scmp.eq.s32.totalorder %s16, 0
    %p100 = por %p98, %p99
    %p101 = scmp.ne.s32.totalorder %s89, %s90
    %p102 = scmp.eq.s32.totalorder %s17, 1
    %p103 = por %p101, %p102
    %p105 = scmp.ne.s32.totalorder %s90, %s104
    %p106 = scmp.eq.s32.totalorder %s17, 0
    %p107 = por %p105, %p106
    %s109 = sadd.s32 %s108, 1
    %p112 = scmp.eq.s32.totalorder %s11, 1
    %p113 = scmp.ne.s32.totalorder %s108, %s110
    %p114 = scmp.eq.s32.totalorder %s11, 0
    %p115 = por %p113, %p114
    %p116 = scmp.ne.s32.totalorder %s108, %s110
    %p117 = scmp.eq.s32.totalorder %s16, 1
    %p118 = por %p116, %p117
    %p119 = scmp.ne.s32.totalorder %s110, %s111
    %p120 = scmp.eq.s32.totalorder %s16, 0
    %p121 = por %p119, %p120
    %p122 = scmp.ne.s32.totalorder %s110, %s111
    %p123 = scmp.eq.s32.totalorder %s17, 1
    %p124 = por %p122, %p123
    %p126 = scmp.ne.s32.totalorder %s111, %s125
    %p127 = scmp.eq.s32.totalorder %s17, 0
    %p128 = por %p126, %p127
    %s129 = ssub.s32 %s11, %s18
    %p130 = scmp.eq.s32.totalorder %s129, 0
    %s132 = sadd.s32 %s131, 1
    %s133 = scalar_select %p130, %s131, %s132
    %p136 = pneg %p130
    %p137 = scmp.eq.s32.totalorder %s11, 1
    %p138 = por %p136, %p137
    %p139 = scmp.ne.s32.totalorder %s131, %s134
    %p140 = scmp.eq.s32.totalorder %s11, 0
    %p141 = por %p139, %p140
    %p142 = scmp.ne.s32.totalorder %s131, %s134
    %p143 = scmp.eq.s32.totalorder %s16, 1
    %p144 = por %p142, %p143
    %p145 = scmp.ne.s32.totalorder %s134, %s135
    %p146 = scmp.eq.s32.totalorder %s16, 0
    %p147 = por %p145, %p146
    %p148 = scmp.ne.s32.totalorder %s134, %s135
    %p149 = scmp.eq.s32.totalorder %s17, 1
    %p150 = por %p148, %p149
    %p152 = scmp.ne.s32.totalorder %s135, %s151
    %p153 = scmp.eq.s32.totalorder %s17, 0
    %p154 = por %p152, %p153
    %p155 = scmp.le.s32.totalorder 1, %s11
    %p156 = scmp.lt.s32.totalorder %s11, 3
    %p157 = pnand %p155, %p156
    %p158 = pneg %p157
    // Predicated region
    $region9: #{feed_forward.1} parent=5 // pred_check
      _
    $region10: #{feed_forward.1} parent=5 // pred_check_branch
      %160 = sbr.rel (%p157) target = $region12
    $region11: #{feed_forward.1} parent=5 // pred_region
      %s161 = ssub.s32 %s11, 1
      // Predicated region
      $region13: #{feed_forward.1} parent=11 // pred_check
        %p162 = pneg %p58
      $region14: #{feed_forward.1} parent=11 // pred_check_branch
        %164 = sbr.rel (%p162) target = $region16
      $region15: #{feed_forward.1} parent=11 // pred_region
        _
      $region16: #{feed_forward.1} parent=11 // pred_fallthru
        _
      // Predicated region
      $region17: #{feed_forward.1} parent=11 // pred_check
        %p165 = pneg %p79
      $region18: #{feed_forward.1} parent=11 // pred_check_branch
        %167 = sbr.rel (%p165) target = $region20
      $region19: #{feed_forward.1} parent=11 // pred_region
        _
      $region20: #{feed_forward.1} parent=11 // pred_fallthru
        _
      // Predicated region
      $region21: #{feed_forward.1} parent=11 // pred_check
        %p168 = pneg %p100
      $region22: #{feed_forward.1} parent=11 // pred_check_branch
        %170 = sbr.rel (%p168) target = $region24
      $region23: #{feed_forward.1} parent=11 // pred_region
        _
      $region24: #{feed_forward.1} parent=11 // pred_fallthru
        _
      // Predicated region
      $region25: #{feed_forward.1} parent=11 // pred_check
        %p171 = pneg %p121
      $region26: #{feed_forward.1} parent=11 // pred_check_branch
        %173 = sbr.rel (%p171) target = $region28
      $region27: #{feed_forward.1} parent=11 // pred_region
        _
      $region28: #{feed_forward.1} parent=11 // pred_fallthru
        _
    $region12: #{feed_forward.1} parent=5 // pred_fallthru
      _
    %p174 = scmp.lt.s32.totalorder %s11, 2
    // Predicated region
    $region29: #{feed_forward.1} parent=5 // pred_check
      %p175 = pneg %p174
    $region30: #{feed_forward.1} parent=5 // pred_check_branch
      %177 = sbr.rel (%p175) target = $region32
    $region31: #{feed_forward.1} parent=5 // pred_region
      // Predicated region
      $region33: #{feed_forward.1} parent=31 // pred_check
        %p178 = pneg %p31
      $region34: #{feed_forward.1} parent=31 // pred_check_branch
        %180 = sbr.rel (%p178) target = $region36
      $region35: #{feed_forward.1} parent=31 // pred_region
        %s181 = smul.u32 2, %s11
        %p182 = scmp.lt.s32.totalorder %s181, 3
        %s183 = scalar_select %p182, %s181, 3
        %s184 = smul.addr %s183, 8
        %s185 = scalar_lea.vmem %s0, %s184
        %s186 = smul.u32 2, %s11
      $region36: #{feed_forward.1} parent=31 // pred_fallthru
        _
    $region32: #{feed_forward.1} parent=5 // pred_fallthru
      _
    %p187 = scmp.le.s32.totalorder 1, %s11
    %p188 = scmp.lt.s32.totalorder %s11, 3
    %p189 = pnand %p187, %p188
    %p190 = pneg %p189
    // Predicated region
    $region37: #{feed_forward.1} parent=5 // pred_check
      _
    $region38: #{feed_forward.1} parent=5 // pred_check_branch
      %192 = sbr.rel (%p189) target = $region40
    $region39: #{feed_forward.1} parent=5 // pred_region
      %s193 = ssub.s32 %s11, 1
      %s194 = smul.u32 2, %s16
      %p195 = scmp.lt.s32.totalorder %s194, 3
      %s196 = scalar_select %p195, %s194, 3
      %s197 = smul.addr %s196, 8
      %s198 = scalar_lea.vmem %s0, %s197
      %p199 = pneg %p37
      %p200 = pneg %p34
      %p201 = pneg %p58
      %p202 = pneg %p55
      %p203 = pneg %p79
      %p204 = pneg %p76
      %p205 = pneg %p100
      %p206 = pneg %p97
      %p207 = pneg %p121
      %p208 = pneg %p118
      %p209 = pneg %p147
      %p210 = pneg %p144
      %s211 = smul.u32 2, %s16
      %p212 = scmp.lt.s32.totalorder %s211, 3
      %s213 = scalar_select %p212, %s211, 3
      %s214 = smul.addr %s213, 8
      %s215 = scalar_lea.vmem %s5, %s214
      %s216 = smul.u32 2, %s16
      %p217 = scmp.lt.s32.totalorder %s216, 3
      %s218 = scalar_select %p217, %s216, 3
      %s219 = smul.addr %s218, 8
      %s220 = scalar_lea.vmem %s0, %s219
      %s221 = smul.u32 2, %s16
      %s222 = smul.u32 2, %s16
      %p223 = scmp.lt.s32.totalorder %s222, 3
      %s224 = scalar_select %p223, %s222, 3
      %s225 = smul.addr %s224, 8
      %s226 = scalar_lea.vmem %s5, %s225
      %s227 = smul.u32 2, %s16
      %v229 = vld [vmem:[%s220] sm:$0xff]
      %v230 = vld [vmem:[%s220 + $0x8] sm:$0xff]
      %231 = vadd.xlane.f32.xlu0 %v229
      %v232 = vpop.xlane.xlu0 %231
      %233 = vadd.xlane.f32.xlu0 %v230
      %v234 = vpop.xlane.xlu0 %233
      %v235 = vrcp.pop 128.0
      %v236 = vmul.f32 %v232, %v235
      %v237 = vmul.f32 %v234, %v235
      %v238 = vsub.f32 %v229, %v236
      %v239 = vsub.f32 %v230, %v237
      %v240 = vmul.f32 %v238, %v238
      %v241 = vmul.f32 %v239, %v239
      %242 = vadd.xlane.f32.xlu0 %v240
      %v243 = vpop.xlane.xlu0 %242
      %244 = vadd.xlane.f32.xlu0 %v241
      %v245 = vpop.xlane.xlu0 %244
      %v246 = vmul.f32 %v243, %v235
      %v247 = vmul.f32 %v245, %v235
      %v248 = vadd.f32 %v246, 1e-05
      %v249 = vadd.f32 %v247, 1e-05
      %v250 = vrsqrt.pop %v248
      %v251 = vrsqrt.pop %v249
      %v252 = vmul.f32 %v238, %v250
      %v253 = vmul.f32 %v239, %v251
      %v254 = vld [vmem:[%s1] sm:$0x1]
      %v256 = vlaneseq
      %v257 = vshrl.u32 %v256, 7
      %v258 = vsub.s32 0, %v257
      %v259 = vrot.slane %v254, %v258
      %v261 = vmul.f32 %v252, %v259
      %v262 = vmul.f32 %v253, %v259
      %v263 = vld [vmem:[%s2] sm:$0x1]
      %v265 = vlaneseq
      %v266 = vshrl.u32 %v265, 7
      %v267 = vsub.s32 0, %v266
      %v268 = vrot.slane %v263, %v267
      %v270 = vadd.f32 %v261, %v268
      %v271 = vadd.f32 %v262, %v268
      %v272 = vpack.c.bf16 %v271, %v270
      %v273 = vld [vmem:[%s3] sm:$0xff]
      %v274 = vld [vmem:[%s3 + $0x8] sm:$0xff]
      %v275 = vld [vmem:[%s3 + $0x10] sm:$0xff]
      %v276 = vld [vmem:[%s3 + $0x18] sm:$0xff]
      %v277 = vld [vmem:[%s3 + $0x20] sm:$0xff]
      %v278 = vld [vmem:[%s3 + $0x28] sm:$0xff]
      %v279 = vld [vmem:[%s3 + $0x30] sm:$0xff]
      %v280 = vld [vmem:[%s3 + $0x38] sm:$0xff]
      %v281 = vld [vmem:[%s3 + $0x40] sm:$0xff]
      %v282 = vld [vmem:[%s3 + $0x48] sm:$0xff]
      %v283 = vld [vmem:[%s3 + $0x50] sm:$0xff]
      %v284 = vld [vmem:[%s3 + $0x58] sm:$0xff]
      %v285 = vld [vmem:[%s3 + $0x60] sm:$0xff]
      %v286 = vld [vmem:[%s3 + $0x68] sm:$0xff]
      %v287 = vld [vmem:[%s3 + $0x70] sm:$0xff]
      %v288 = vld [vmem:[%s3 + $0x78] sm:$0xff]
      %v289 = vld [vmem:[%s3 + $0x80] sm:$0xff]
      %v290 = vld [vmem:[%s3 + $0x88] sm:$0xff]
      %v291 = vld [vmem:[%s3 + $0x90] sm:$0xff]
      %v292 = vld [vmem:[%s3 + $0x98] sm:$0xff]
      %v293 = vld [vmem:[%s3 + $0xa0] sm:$0xff]
      %v294 = vld [vmem:[%s3 + $0xa8] sm:$0xff]
      %v295 = vld [vmem:[%s3 + $0xb0] sm:$0xff]
      %v296 = vld [vmem:[%s3 + $0xb8] sm:$0xff]
      %v297 = vld [vmem:[%s3 + $0xc0] sm:$0xff]
      %v298 = vld [vmem:[%s3 + $0xc8] sm:$0xff]
      %v299 = vld [vmem:[%s3 + $0xd0] sm:$0xff]
      %v300 = vld [vmem:[%s3 + $0xd8] sm:$0xff]
      %v301 = vld [vmem:[%s3 + $0xe0] sm:$0xff]
      %v302 = vld [vmem:[%s3 + $0xe8] sm:$0xff]
      %v303 = vld [vmem:[%s3 + $0xf0] sm:$0xff]
      %v304 = vld [vmem:[%s3 + $0xf8] sm:$0xff]
      %v337 = vunpack.c.l.b16 %v273
      %v338 = vunpack.c.h.b16 %v273
      %v339 = vunpack.c.l.b16 %v274
      %v340 = vunpack.c.h.b16 %v274
      %v341 = vunpack.c.l.b16 %v275
      %v342 = vunpack.c.h.b16 %v275
      %v343 = vunpack.c.l.b16 %v276
      %v344 = vunpack.c.h.b16 %v276
      %v345 = vunpack.c.l.b16 %v277
      %v346 = vunpack.c.h.b16 %v277
      %v347 = vunpack.c.l.b16 %v278
      %v348 = vunpack.c.h.b16 %v278
      %v349 = vunpack.c.l.b16 %v279
      %v350 = vunpack.c.h.b16 %v279
      %v351 = vunpack.c.l.b16 %v280
      %v352 = vunpack.c.h.b16 %v280
      %v353 = vunpack.c.l.b16 %v281
      %v354 = vunpack.c.h.b16 %v281
      %v355 = vunpack.c.l.b16 %v282
      %v356 = vunpack.c.h.b16 %v282
      %v357 = vunpack.c.l.b16 %v283
      %v358 = vunpack.c.h.b16 %v283
      %v359 = vunpack.c.l.b16 %v284
      %v360 = vunpack.c.h.b16 %v284
      %v361 = vunpack.c.l.b16 %v285
      %v362 = vunpack.c.h.b16 %v285
      %v363 = vunpack.c.l.b16 %v286
      %v364 = vunpack.c.h.b16 %v286
      %v365 = vunpack.c.l.b16 %v287
      %v366 = vunpack.c.h.b16 %v287
      %v367 = vunpack.c.l.b16 %v288
      %v368 = vunpack.c.h.b16 %v288
      %v369 = vunpack.c.l.b16 %v289
      %v370 = vunpack.c.h.b16 %v289
      %v371 = vunpack.c.l.b16 %v290
      %v372 = vunpack.c.h.b16 %v290
      %v373 = vunpack.c.l.b16 %v291
      %v374 = vunpack.c.h.b16 %v291
      %v375 = vunpack.c.l.b16 %v292
      %v376 = vunpack.c.h.b16 %v292
      %v377 = vunpack.c.l.b16 %v293
      %v378 = vunpack.c.h.b16 %v293
      %v379 = vunpack.c.l.b16 %v294
      %v380 = vunpack.c.h.b16 %v294
      %v381 = vunpack.c.l.b16 %v295
      %v382 = vunpack.c.h.b16 %v295
      %v383 = vunpack.c.l.b16 %v296
      %v384 = vunpack.c.h.b16 %v296
      %v385 = vunpack.c.l.b16 %v297
      %v386 = vunpack.c.h.b16 %v297
      %v387 = vunpack.c.l.b16 %v298
      %v388 = vunpack.c.h.b16 %v298
      %v389 = vunpack.c.l.b16 %v299
      %v390 = vunpack.c.h.b16 %v299
      %v391 = vunpack.c.l.b16 %v300
      %v392 = vunpack.c.h.b16 %v300
      %v393 = vunpack.c.l.b16 %v301
      %v394 = vunpack.c.h.b16 %v301
      %v395 = vunpack.c.l.b16 %v302
      %v396 = vunpack.c.h.b16 %v302
      %v397 = vunpack.c.l.b16 %v303
      %v398 = vunpack.c.h.b16 %v303
      %v399 = vunpack.c.l.b16 %v304
      %v400 = vunpack.c.h.b16 %v304
      %v401 = vpack.c.b16 %v341, %v337
      %v402 = vpack.c.b16 %v342, %v338
      %v403 = vpack.c.b16 %v343, %v339
      %v404 = vpack.c.b16 %v344, %v340
      %v405 = vpack.c.b16 %v349, %v345
      %v406 = vpack.c.b16 %v350, %v346
      %v407 = vpack.c.b16 %v351, %v347
      %v408 = vpack.c.b16 %v352, %v348
      %v409 = vpack.c.b16 %v357, %v353
      %v410 = vpack.c.b16 %v358, %v354
      %v411 = vpack.c.b16 %v359, %v355
      %v412 = vpack.c.b16 %v360, %v356
      %v413 = vpack.c.b16 %v365, %v361
      %v414 = vpack.c.b16 %v366, %v362
      %v415 = vpack.c.b16 %v367, %v363
      %v416 = vpack.c.b16 %v368, %v364
      %v417 = vpack.c.b16 %v373, %v369
      %v418 = vpack.c.b16 %v374, %v370
      %v419 = vpack.c.b16 %v375, %v371
      %v420 = vpack.c.b16 %v376, %v372
      %v421 = vpack.c.b16 %v381, %v377
      %v422 = vpack.c.b16 %v382, %v378
      %v423 = vpack.c.b16 %v383, %v379
      %v424 = vpack.c.b16 %v384, %v380
      %v425 = vpack.c.b16 %v389, %v385
      %v426 = vpack.c.b16 %v390, %v386
      %v427 = vpack.c.b16 %v391, %v387
      %v428 = vpack.c.b16 %v392, %v388
      %v429 = vpack.c.b16 %v397, %v393
      %v430 = vpack.c.b16 %v398, %v394
      %v431 = vpack.c.b16 %v399, %v395
      %v432 = vpack.c.b16 %v400, %v396
      %465 = vmatprep.subr.bf16.mxu0 %v430
      %466 = vmatpush1.bf16.msra.mxu0 %v429
      %467 = vmatprep.subr.bf16.mxu0 %v426
      %468 = vmatpush1.bf16.msra.mxu0 %v425
      %469 = vmatprep.subr.bf16.mxu0 %v422
      %470 = vmatpush1.bf16.msra.mxu0 %v421
      %471 = vmatprep.subr.bf16.mxu0 %v418
      %472 = vmatpush1.bf16.msra.mxu0 %v417
      %473 = vmatprep.subr.bf16.mxu0 %v414
      %474 = vmatpush1.bf16.msra.mxu0 %v413
      %475 = vmatprep.subr.bf16.mxu0 %v410
      %476 = vmatpush1.bf16.msra.mxu0 %v409
      %477 = vmatprep.subr.bf16.mxu0 %v406
      %478 = vmatpush1.bf16.msra.mxu0 %v405
      %479 = vmatprep.subr.bf16.mxu0 %v402
      %480 = vmatpush1.bf16.msra.mxu0 %v401
      %481 = vmatprep.subr.bf16.mxu0 0
      %482 = vmatpush2.bf16.msra.mxu0 0
      %483 = vmatprep.subr.bf16.mxu0 0
      %484 = vmatpush2.bf16.msra.mxu0 0
      %485 = vmatprep.subr.bf16.mxu0 0
      %486 = vmatpush2.bf16.msra.mxu0 0
      %487 = vmatprep.subr.bf16.mxu0 0
      %488 = vmatpush2.bf16.msra.mxu0 0
      %489 = vmatprep.subr.bf16.mxu0 0
      %490 = vmatpush2.bf16.msra.mxu0 0
      %491 = vmatprep.subr.bf16.mxu0 0
      %492 = vmatpush2.bf16.msra.mxu0 0
      %493 = vmatprep.subr.bf16.mxu0 0
      %494 = vmatpush2.bf16.msra.mxu0 0
      %495 = vmatprep.subr.bf16.mxu0 0
      %496 = vmatpush2.bf16.msra.mxu0 0
      %497 = vmatprep.mubr.bf16.mxu0 0
      %498 = vmatmul.mubr.bf16.gmra.mxu0 %v272
      %v499 = vpop.f32.mrf.mxu0
      %v500 = vadd.f32 0.0, %v499
      %v501 = vpop.f32.mrf.mxu0
      %v502 = vadd.f32 0.0, %v501
      %v503 = vpop.f32.mrf.mxu0
      %v504 = vadd.f32 0.0, %v503
      %v505 = vpop.f32.mrf.mxu0
      %v506 = vadd.f32 0.0, %v505
      %507 = vdwg.mxu0
      %508 = vmatprep.subr.bf16.mxu0 %v432
      %509 = vmatpush1.bf16.msra.mxu0 %v431
      %510 = vmatprep.subr.bf16.mxu0 %v428
      %511 = vmatpush1.bf16.msra.mxu0 %v427
      %512 = vmatprep.subr.bf16.mxu0 %v424
      %513 = vmatpush1.bf16.msra.mxu0 %v423
      %514 = vmatprep.subr.bf16.mxu0 %v420
      %515 = vmatpush1.bf16.msra.mxu0 %v419
      %516 = vmatprep.subr.bf16.mxu0 %v416
      %517 = vmatpush1.bf16.msra.mxu0 %v415
      %518 = vmatprep.subr.bf16.mxu0 %v412
      %519 = vmatpush1.bf16.msra.mxu0 %v411
      %520 = vmatprep.subr.bf16.mxu0 %v408
      %521 = vmatpush1.bf16.msra.mxu0 %v407
      %522 = vmatprep.subr.bf16.mxu0 %v404
      %523 = vmatpush1.bf16.msra.mxu0 %v403
      %524 = vmatprep.subr.bf16.mxu0 0
      %525 = vmatpush2.bf16.msra.mxu0 0
      %526 = vmatprep.subr.bf16.mxu0 0
      %527 = vmatpush2.bf16.msra.mxu0 0
      %528 = vmatprep.subr.bf16.mxu0 0
      %529 = vmatpush2.bf16.msra.mxu0 0
      %530 = vmatprep.subr.bf16.mxu0 0
      %531 = vmatpush2.bf16.msra.mxu0 0
      %532 = vmatprep.subr.bf16.mxu0 0
      %533 = vmatpush2.bf16.msra.mxu0 0
      %534 = vmatprep.subr.bf16.mxu0 0
      %535 = vmatpush2.bf16.msra.mxu0 0
      %536 = vmatprep.subr.bf16.mxu0 0
      %537 = vmatpush2.bf16.msra.mxu0 0
      %538 = vmatprep.subr.bf16.mxu0 0
      %539 = vmatpush2.bf16.msra.mxu0 0
      %540 = vmatprep.mubr.bf16.mxu0 0
      %541 = vmatmul.mubr.bf16.gmra.mxu0 %v272
      %v542 = vpop.f32.mrf.mxu0
      %v543 = vadd.f32 0.0, %v542
      %v544 = vpop.f32.mrf.mxu0
      %v545 = vadd.f32 0.0, %v544
      %v546 = vpop.f32.mrf.mxu0
      %v547 = vadd.f32 0.0, %v546
      %v548 = vpop.f32.mrf.mxu0
      %v549 = vadd.f32 0.0, %v548
      %550 = vdwg.mxu0
      %v551 = vmul.f32 %v500, 0.5
      %v552 = vmul.f32 %v502, 0.5
      %v553 = vmul.f32 %v543, 0.5
      %v554 = vmul.f32 %v545, 0.5
      %v555 = vmul.f32 %v504, 0.5
      %v556 = vmul.f32 %v506, 0.5
      %v557 = vmul.f32 %v547, 0.5
      %v558 = vmul.f32 %v549, 0.5
      %v559 = vmul.f32 %v500, 0.044715
      %v560 = vmul.f32 %v502, 0.044715
      %v561 = vmul.f32 %v543, 0.044715
      %v562 = vmul.f32 %v545, 0.044715
      %v563 = vmul.f32 %v504, 0.044715
      %v564 = vmul.f32 %v506, 0.044715
      %v565 = vmul.f32 %v547, 0.044715
      %v566 = vmul.f32 %v549, 0.044715
      %v567 = vmul.f32 %v559, %v500
      %v568 = vmul.f32 %v560, %v502
      %v569 = vmul.f32 %v561, %v543
      %v570 = vmul.f32 %v562, %v545
      %v571 = vmul.f32 %v563, %v504
      %v572 = vmul.f32 %v564, %v506
      %v573 = vmul.f32 %v565, %v547
      %v574 = vmul.f32 %v566, %v549
      %v575 = vmul.f32 %v567, %v500
      %v576 = vmul.f32 %v568, %v502
      %v577 = vmul.f32 %v569, %v543
      %v578 = vmul.f32 %v570, %v545
      %v579 = vmul.f32 %v571, %v504
      %v580 = vmul.f32 %v572, %v506
      %v581 = vmul.f32 %v573, %v547
      %v582 = vmul.f32 %v574, %v549
      %v583 = vadd.f32 %v500, %v575
      %v584 = vadd.f32 %v502, %v576
      %v585 = vadd.f32 %v543, %v577
      %v586 = vadd.f32 %v545, %v578
      %v587 = vadd.f32 %v504, %v579
      %v588 = vadd.f32 %v506, %v580
      %v589 = vadd.f32 %v547, %v581
      %v590 = vadd.f32 %v549, %v582
      %v591 = vmul.f32 %v583, 0.7978846
      %v592 = vmul.f32 %v584, 0.7978846
      %v593 = vmul.f32 %v585, 0.7978846
      %v594 = vmul.f32 %v586, 0.7978846
      %v595 = vmul.f32 %v587, 0.7978846
      %v596 = vmul.f32 %v588, 0.7978846
      %v597 = vmul.f32 %v589, 0.7978846
      %v598 = vmul.f32 %v590, 0.7978846
      %v599 = vtanh.pop %v591
      %v600 = vtanh.pop %v592
      %v601 = vtanh.pop %v593
      %v602 = vtanh.pop %v594
      %v603 = vtanh.pop %v595
      %v604 = vtanh.pop %v596
      %v605 = vtanh.pop %v597
      %v606 = vtanh.pop %v598
      %v607 = vadd.f32 %v599, 1.0
      %v608 = vadd.f32 %v600, 1.0
      %v609 = vadd.f32 %v601, 1.0
      %v610 = vadd.f32 %v602, 1.0
      %v611 = vadd.f32 %v603, 1.0
      %v612 = vadd.f32 %v604, 1.0
      %v613 = vadd.f32 %v605, 1.0
      %v614 = vadd.f32 %v606, 1.0
      %v615 = vmul.f32 %v551, %v607
      %v616 = vmul.f32 %v552, %v608
      %v617 = vmul.f32 %v553, %v609
      %v618 = vmul.f32 %v554, %v610
      %v619 = vmul.f32 %v555, %v611
      %v620 = vmul.f32 %v556, %v612
      %v621 = vmul.f32 %v557, %v613
      %v622 = vmul.f32 %v558, %v614
      %v623 = vpack.c.bf16 %v619, %v615
      %v624 = vpack.c.bf16 %v620, %v616
      %v625 = vpack.c.bf16 %v621, %v617
      %v626 = vpack.c.bf16 %v622, %v618
      %v627 = vld [vmem:[%s4] sm:$0xf]
      %v628 = vld [vmem:[%s4 + $0x4] sm:$0xf]
      %v629 = vld [vmem:[%s4 + $0x8] sm:$0xf]
      %v630 = vld [vmem:[%s4 + $0xc] sm:$0xf]
      %v631 = vld [vmem:[%s4 + $0x10] sm:$0xf]
      %v632 = vld [vmem:[%s4 + $0x14] sm:$0xf]
      %v633 = vld [vmem:[%s4 + $0x18] sm:$0xf]
      %v634 = vld [vmem:[%s4 + $0x1c] sm:$0xf]
      %v635 = vld [vmem:[%s4 + $0x20] sm:$0xf]
      %v636 = vld [vmem:[%s4 + $0x24] sm:$0xf]
      %v637 = vld [vmem:[%s4 + $0x28] sm:$0xf]
      %v638 = vld [vmem:[%s4 + $0x2c] sm:$0xf]
      %v639 = vld [vmem:[%s4 + $0x30] sm:$0xf]
      %v640 = vld [vmem:[%s4 + $0x34] sm:$0xf]
      %v641 = vld [vmem:[%s4 + $0x38] sm:$0xf]
      %v642 = vld [vmem:[%s4 + $0x3c] sm:$0xf]
      %v643 = vld [vmem:[%s4 + $0x40] sm:$0xf]
      %v644 = vld [vmem:[%s4 + $0x44] sm:$0xf]
      %v645 = vld [vmem:[%s4 + $0x48] sm:$0xf]
      %v646 = vld [vmem:[%s4 + $0x4c] sm:$0xf]
      %v647 = vld [vmem:[%s4 + $0x50] sm:$0xf]
      %v648 = vld [vmem:[%s4 + $0x54] sm:$0xf]
      %v649 = vld [vmem:[%s4 + $0x58] sm:$0xf]
      %v650 = vld [vmem:[%s4 + $0x5c] sm:$0xf]
      %v651 = vld [vmem:[%s4 + $0x60] sm:$0xf]
      %v652 = vld [vmem:[%s4 + $0x64] sm:$0xf]
      %v653 = vld [vmem:[%s4 + $0x68] sm:$0xf]
      %v654 = vld [vmem:[%s4 + $0x6c] sm:$0xf]
      %v655 = vld [vmem:[%s4 + $0x70] sm:$0xf]
      %v656 = vld [vmem:[%s4 + $0x74] sm:$0xf]
      %v657 = vld [vmem:[%s4 + $0x78] sm:$0xf]
      %v658 = vld [vmem:[%s4 + $0x7c] sm:$0xf]
      %v659 = vld [vmem:[%s4 + $0x80] sm:$0xf]
      %v660 = vld [vmem:[%s4 + $0x84] sm:$0xf]
      %v661 = vld [vmem:[%s4 + $0x88] sm:$0xf]
      %v662 = vld [vmem:[%s4 + $0x8c] sm:$0xf]
      %v663 = vld [vmem:[%s4 + $0x90] sm:$0xf]
      %v664 = vld [vmem:[%s4 + $0x94] sm:$0xf]
      %v665 = vld [vmem:[%s4 + $0x98] sm:$0xf]
      %v666 = vld [vmem:[%s4 + $0x9c] sm:$0xf]
      %v667 = vld [vmem:[%s4 + $0xa0] sm:$0xf]
      %v668 = vld [vmem:[%s4 + $0xa4] sm:$0xf]
      %v669 = vld [vmem:[%s4 + $0xa8] sm:$0xf]
      %v670 = vld [vmem:[%s4 + $0xac] sm:$0xf]
      %v671 = vld [vmem:[%s4 + $0xb0] sm:$0xf]
      %v672 = vld [vmem:[%s4 + $0xb4] sm:$0xf]
      %v673 = vld [vmem:[%s4 + $0xb8] sm:$0xf]
      %v674 = vld [vmem:[%s4 + $0xbc] sm:$0xf]
      %v675 = vld [vmem:[%s4 + $0xc0] sm:$0xf]
      %v676 = vld [vmem:[%s4 + $0xc4] sm:$0xf]
      %v677 = vld [vmem:[%s4 + $0xc8] sm:$0xf]
      %v678 = vld [vmem:[%s4 + $0xcc] sm:$0xf]
      %v679 = vld [vmem:[%s4 + $0xd0] sm:$0xf]
      %v680 = vld [vmem:[%s4 + $0xd4] sm:$0xf]
      %v681 = vld [vmem:[%s4 + $0xd8] sm:$0xf]
      %v682 = vld [vmem:[%s4 + $0xdc] sm:$0xf]
      %v683 = vld [vmem:[%s4 + $0xe0] sm:$0xf]
      %v684 = vld [vmem:[%s4 + $0xe4] sm:$0xf]
      %v685 = vld [vmem:[%s4 + $0xe8] sm:$0xf]
      %v686 = vld [vmem:[%s4 + $0xec] sm:$0xf]
      %v687 = vld [vmem:[%s4 + $0xf0] sm:$0xf]
      %v688 = vld [vmem:[%s4 + $0xf4] sm:$0xf]
      %v689 = vld [vmem:[%s4 + $0xf8] sm:$0xf]
      %v690 = vld [vmem:[%s4 + $0xfc] sm:$0xf]
      %v755 = vunpack.c.l.b16 %v627
      %v756 = vunpack.c.l.b16 %v628
      %v757 = vunpack.c.l.b16 %v629
      %v758 = vunpack.c.l.b16 %v630
      %v759 = vunpack.c.l.b16 %v631
      %v760 = vunpack.c.l.b16 %v632
      %v761 = vunpack.c.l.b16 %v633
      %v762 = vunpack.c.l.b16 %v634
      %v763 = vunpack.c.l.b16 %v635
      %v764 = vunpack.c.l.b16 %v636
      %v765 = vunpack.c.l.b16 %v637
      %v766 = vunpack.c.l.b16 %v638
      %v767 = vunpack.c.l.b16 %v639
      %v768 = vunpack.c.l.b16 %v640
      %v769 = vunpack.c.l.b16 %v641
      %v770 = vunpack.c.l.b16 %v642
      %v771 = vunpack.c.l.b16 %v643
      %v772 = vunpack.c.l.b16 %v644
      %v773 = vunpack.c.l.b16 %v645
      %v774 = vunpack.c.l.b16 %v646
      %v775 = vunpack.c.l.b16 %v647
      %v776 = vunpack.c.l.b16 %v648
      %v777 = vunpack.c.l.b16 %v649
      %v778 = vunpack.c.l.b16 %v650
      %v779 = vunpack.c.l.b16 %v651
      %v780 = vunpack.c.l.b16 %v652
      %v781 = vunpack.c.l.b16 %v653
      %v782 = vunpack.c.l.b16 %v654
      %v783 = vunpack.c.l.b16 %v655
      %v784 = vunpack.c.l.b16 %v656
      %v785 = vunpack.c.l.b16 %v657
      %v786 = vunpack.c.l.b16 %v658
      %v787 = vunpack.c.l.b16 %v659
      %v788 = vunpack.c.l.b16 %v660
      %v789 = vunpack.c.l.b16 %v661
      %v790 = vunpack.c.l.b16 %v662
      %v791 = vunpack.c.l.b16 %v663
      %v792 = vunpack.c.l.b16 %v664
      %v793 = vunpack.c.l.b16 %v665
      %v794 = vunpack.c.l.b16 %v666
      %v795 = vunpack.c.l.b16 %v667
      %v796 = vunpack.c.l.b16 %v668
      %v797 = vunpack.c.l.b16 %v669
      %v798 = vunpack.c.l.b16 %v670
      %v799 = vunpack.c.l.b16 %v671
      %v800 = vunpack.c.l.b16 %v672
      %v801 = vunpack.c.l.b16 %v673
      %v802 = vunpack.c.l.b16 %v674
      %v803 = vunpack.c.l.b16 %v675
      %v804 = vunpack.c.l.b16 %v676
      %v805 = vunpack.c.l.b16 %v677
      %v806 = vunpack.c.l.b16 %v678
      %v807 = vunpack.c.l.b16 %v679
      %v808 = vunpack.c.l.b16 %v680
      %v809 = vunpack.c.l.b16 %v681
      %v810 = vunpack.c.l.b16 %v682
      %v811 = vunpack.c.l.b16 %v683
      %v812 = vunpack.c.l.b16 %v684
      %v813 = vunpack.c.l.b16 %v685
      %v814 = vunpack.c.l.b16 %v686
      %v815 = vunpack.c.l.b16 %v687
      %v816 = vunpack.c.l.b16 %v688
      %v817 = vunpack.c.l.b16 %v689
      %v818 = vunpack.c.l.b16 %v690
      %v819 = vpack.c.b16 %v756, %v755
      %v820 = vpack.c.b16 %v758, %v757
      %v821 = vpack.c.b16 %v760, %v759
      %v822 = vpack.c.b16 %v762, %v761
      %v823 = vpack.c.b16 %v764, %v763
      %v824 = vpack.c.b16 %v766, %v765
      %v825 = vpack.c.b16 %v768, %v767
      %v826 = vpack.c.b16 %v770, %v769
      %v827 = vpack.c.b16 %v772, %v771
      %v828 = vpack.c.b16 %v774, %v773
      %v829 = vpack.c.b16 %v776, %v775
      %v830 = vpack.c.b16 %v778, %v777
      %v831 = vpack.c.b16 %v780, %v779
      %v832 = vpack.c.b16 %v782, %v781
      %v833 = vpack.c.b16 %v784, %v783
      %v834 = vpack.c.b16 %v786, %v785
      %v835 = vpack.c.b16 %v788, %v787
      %v836 = vpack.c.b16 %v790, %v789
      %v837 = vpack.c.b16 %v792, %v791
      %v838 = vpack.c.b16 %v794, %v793
      %v839 = vpack.c.b16 %v796, %v795
      %v840 = vpack.c.b16 %v798, %v797
      %v841 = vpack.c.b16 %v800, %v799
      %v842 = vpack.c.b16 %v802, %v801
      %v843 = vpack.c.b16 %v804, %v803
      %v844 = vpack.c.b16 %v806, %v805
      %v845 = vpack.c.b16 %v808, %v807
      %v846 = vpack.c.b16 %v810, %v809
      %v847 = vpack.c.b16 %v812, %v811
      %v848 = vpack.c.b16 %v814, %v813
      %v849 = vpack.c.b16 %v816, %v815
      %v850 = vpack.c.b16 %v818, %v817
      %883 = vmatprep.subr.bf16.mxu0 0
      %884 = vmatpush1.bf16.msra.mxu0 %v826
      %885 = vmatprep.subr.bf16.mxu0 0
      %886 = vmatpush1.bf16.msra.mxu0 %v825
      %887 = vmatprep.subr.bf16.mxu0 0
      %888 = vmatpush1.bf16.msra.mxu0 %v824
      %889 = vmatprep.subr.bf16.mxu0 0
      %890 = vmatpush1.bf16.msra.mxu0 %v823
      %891 = vmatprep.subr.bf16.mxu0 0
      %892 = vmatpush1.bf16.msra.mxu0 %v822
      %893 = vmatprep.subr.bf16.mxu0 0
      %894 = vmatpush1.bf16.msra.mxu0 %v821
      %895 = vmatprep.subr.bf16.mxu0 0
      %896 = vmatpush1.bf16.msra.mxu0 %v820
      %897 = vmatprep.subr.bf16.mxu0 0
      %898 = vmatpush1.bf16.msra.mxu0 %v819
      %899 = vmatprep.subr.bf16.mxu0 0
      %900 = vmatpush2.bf16.msra.mxu0 %v834
      %901 = vmatprep.subr.bf16.mxu0 0
      %902 = vmatpush2.bf16.msra.mxu0 %v833
      %903 = vmatprep.subr.bf16.mxu0 0
      %904 = vmatpush2.bf16.msra.mxu0 %v832
      %905 = vmatprep.subr.bf16.mxu0 0
      %906 = vmatpush2.bf16.msra.mxu0 %v831
      %907 = vmatprep.subr.bf16.mxu0 0
      %908 = vmatpush2.bf16.msra.mxu0 %v830
      %909 = vmatprep.subr.bf16.mxu0 0
      %910 = vmatpush2.bf16.msra.mxu0 %v829
      %911 = vmatprep.subr.bf16.mxu0 0
      %912 = vmatpush2.bf16.msra.mxu0 %v828
      %913 = vmatprep.subr.bf16.mxu0 0
      %914 = vmatpush2.bf16.msra.mxu0 %v827
      %915 = vmatprep.mubr.bf16.mxu0 %v624
      %916 = vmatmul.mubr.bf16.gmra.mxu0 %v623
      %v917 = vpop.f32.mrf.mxu0
      %v918 = vadd.f32 0.0, %v917
      %v919 = vpop.f32.mrf.mxu0
      %v920 = vpop.f32.mrf.mxu0
      %v921 = vadd.f32 0.0, %v920
      %v922 = vpop.f32.mrf.mxu0
      %923 = vdwg.mxu0
      %924 = vmatprep.subr.bf16.mxu0 0
      %925 = vmatpush1.bf16.msra.mxu0 %v842
      %926 = vmatprep.subr.bf16.mxu0 0
      %927 = vmatpush1.bf16.msra.mxu0 %v841
      %928 = vmatprep.subr.bf16.mxu0 0
      %929 = vmatpush1.bf16.msra.mxu0 %v840
      %930 = vmatprep.subr.bf16.mxu0 0
      %931 = vmatpush1.bf16.msra.mxu0 %v839
      %932 = vmatprep.subr.bf16.mxu0 0
      %933 = vmatpush1.bf16.msra.mxu0 %v838
      %934 = vmatprep.subr.bf16.mxu0 0
      %935 = vmatpush1.bf16.msra.mxu0 %v837
      %936 = vmatprep.subr.bf16.mxu0 0
      %937 = vmatpush1.bf16.msra.mxu0 %v836
      %938 = vmatprep.subr.bf16.mxu0 0
      %939 = vmatpush1.bf16.msra.mxu0 %v835
      %940 = vmatprep.subr.bf16.mxu0 0
      %941 = vmatpush2.bf16.msra.mxu0 %v850
      %942 = vmatprep.subr.bf16.mxu0 0
      %943 = vmatpush2.bf16.msra.mxu0 %v849
      %944 = vmatprep.subr.bf16.mxu0 0
      %945 = vmatpush2.bf16.msra.mxu0 %v848
      %946 = vmatprep.subr.bf16.mxu0 0
      %947 = vmatpush2.bf16.msra.mxu0 %v847
      %948 = vmatprep.subr.bf16.mxu0 0
      %949 = vmatpush2.bf16.msra.mxu0 %v846
      %950 = vmatprep.subr.bf16.mxu0 0
      %951 = vmatpush2.bf16.msra.mxu0 %v845
      %952 = vmatprep.subr.bf16.mxu0 0
      %953 = vmatpush2.bf16.msra.mxu0 %v844
      %954 = vmatprep.subr.bf16.mxu0 0
      %955 = vmatpush2.bf16.msra.mxu0 %v843
      %956 = vmatprep.mubr.bf16.mxu0 %v626
      %957 = vmatmul.mubr.bf16.gmra.mxu0 %v625
      %v958 = vpop.f32.mrf.mxu0
      %v959 = vadd.f32 %v918, %v958
      %v960 = vpop.f32.mrf.mxu0
      %v961 = vpop.f32.mrf.mxu0
      %v962 = vadd.f32 %v921, %v961
      %v963 = vpop.f32.mrf.mxu0
      %964 = vdwg.mxu0
      %965 = vst [vmem:[%s226] sm:$0xff] %v959
      %966 = vst [vmem:[%s226 + $0x8] sm:$0xff] %v962
      %s967 = smul.u32 2, %s16
      %p968 = scmp.lt.s32.totalorder %s967, 3
      %s969 = scalar_select %p968, %s967, 3
      %s970 = smul.addr %s969, 8
      %s971 = scalar_lea.vmem %s5, %s970
      // Predicated region
      $region41: #{feed_forward.1} parent=39 // pred_check
        %p972 = pneg %p144
      $region42: #{feed_forward.1} parent=39 // pred_check_branch
        %974 = sbr.rel (%p972) target = $region44
      $region43: #{feed_forward.1} parent=39 // pred_region
        %s975 = smul.u32 2, %s16
      $region44: #{feed_forward.1} parent=39 // pred_fallthru
        _
    $region40: #{feed_forward.1} parent=5 // pred_fallthru
      _
    %p976 = scmp.le.s32.totalorder 2, %s11
    // Predicated region
    $region45: #{feed_forward.1} parent=5 // pred_check
      %p977 = pneg %p976
    $region46: #{feed_forward.1} parent=5 // pred_check_branch
      %979 = sbr.rel (%p977) target = $region48
    $region47: #{feed_forward.1} parent=5 // pred_region
      %s980 = ssub.s32 %s11, 2
      // Predicated region
      $region49: #{feed_forward.1} parent=47 // pred_check
        %p981 = pneg %p150
      $region50: #{feed_forward.1} parent=47 // pred_check_branch
        %983 = sbr.rel (%p981) target = $region52
      $region51: #{feed_forward.1} parent=47 // pred_region
        %s984 = smul.u32 2, %s17
        %p985 = scmp.lt.s32.totalorder %s984, 3
        %s986 = scalar_select %p985, %s984, 3
        %s987 = smul.addr %s986, 8
        %s988 = scalar_lea.vmem %s5, %s987
      $region52: #{feed_forward.1} parent=47 // pred_fallthru
        _
    $region48: #{feed_forward.1} parent=5 // pred_fallthru
      _
  $region6: #{feed_forward.1} parent=0 // loop_footer
    %s15 = sadd.s32 1, %s11
  $region7: #{feed_forward.1} parent=0 // loop_footer_branch
    %10 = sbr.rel target = $region3
  $region8: #{feed_forward.1} parent=0 // loop_exit
    _

</llo_original>
